<compile_context>
chip_gen: v5e
topology: v5e:2x2
jax: 0.10.0
libtpu: 0.0.40
codegen_flags: <defaults>
</compile_context>

<pallas_src>
import functools

import jax
import jax.numpy as jnp
from jax.experimental import pallas as pl
from jax.experimental.pallas import tpu as pltpu


def _round_up(x: int, m: int) -> int:
    return ((x + m - 1) // m) * m


def _max_encoder_kernel(x_ref, w1_ref, b1_ref, w2_ref, b2_ref,
                        w3_ref, b3_ref, w4_ref, b4_ref,
                        out_ref, acc_ref, *, n_valid):
    """One (batch_tile, n_tile) grid step.

    x_ref  : (Bt, C, Nt)  f32   input tile, NCW layout, N lane-dense
    w1_ref : (D, C)  f32   b1_ref: (D, 1)  f32   first pointwise conv (out, in)
    w2_ref : (D, D)  bf16  b2_ref: (D, 1)  f32   second pointwise conv (out, in)
    w3_ref : (D, D)  f32   b3_ref: (1, D)  f32   first linear (in, out)
    w4_ref : (D, Op) f32   b4_ref: (1, Op) f32   second linear (in, out), lane padded
    out_ref: (Bt, Op) f32
    acc_ref: (Bt, D)  f32 scratch, running max over N tiles
    """
    n_step = pl.program_id(1)
    n_steps = pl.num_programs(1)

    bt, c_in, n_tile = x_ref.shape
    d = w1_ref.shape[0]

    # ---- init running-max accumulator on the first N step -------------------
    @pl.when(n_step == 0)
    def _init():
        acc_ref[...] = jnp.full(acc_ref.shape, -jnp.inf, acc_ref.dtype)

    # Hoisted (per grid step) weight/bias views — tiny, D elements each.
    w1 = w1_ref[...]                                    # (D, C)
    w1_cols = [w1[:, c:c + 1] for c in range(c_in)]     # C x (D, 1)
    b1_col = b1_ref[...]                                # (D, 1)
    b2_col = b2_ref[...]                                # (D, 1)
    w2 = w2_ref[...]                                    # (D, D), matmul dtype

    # Lane-validity mask for a padded final N tile (static decision).
    need_mask = (n_valid % n_tile) != 0
    if need_mask:
        lane = jax.lax.broadcasted_iota(jnp.int32, (1, n_tile), 1)
        valid = (n_step * n_tile + lane) < n_valid      # (1, Nt) bool

    # Static unroll over the (small) batch tile.
    for b in range(bt):
        xb = x_ref[b]                                   # (C, Nt) f32

        # layer 1: pointwise conv C -> D as C broadcast FMAs on the VPU
        # (contraction depth C is tiny; keep the MXU free for the D x D conv).
        hb = w1_cols[0] * xb[0:1, :]
        for c in range(1, c_in):
            hb = hb + w1_cols[c] * xb[c:c + 1, :]
        hb = jnp.maximum(hb + b1_col, 0.0)              # (D, Nt) f32

        # layer 2: pointwise conv D -> D on the MXU, f32 accumulation.
        h2b = jnp.dot(w2, hb.astype(w2.dtype),
                      preferred_element_type=jnp.float32) + b2_col  # (D, Nt)

        # per-tile max over points, folded into the running max accumulator.
        if need_mask:
            h2b = jnp.where(valid, h2b, -jnp.inf)
        tile_max = jnp.max(h2b, axis=1)                 # (D,)
        acc_ref[b, :] = jnp.maximum(acc_ref[b, :], tile_max)

    # ---- MLP head: runs exactly once, on the last N step --------------------
    @pl.when(n_step == n_steps - 1)
    def _head():
        pooled = acc_ref[...]                           # (Bt, D) f32
        z = jnp.dot(pooled, w3_ref[...],
                    preferred_element_type=jnp.float32) + b3_ref[...]
        z = jnp.maximum(z, 0.0)
        y = jnp.dot(z, w4_ref[...],
                    preferred_element_type=jnp.float32) + b4_ref[...]
        out_ref[...] = y.astype(out_ref.dtype)          # lane-dense (Bt, Op)


def max_encoder(x_ncw, params, n_points=None, *,
                n_tile=None, batch_tile=None, matmul_dtype=jnp.bfloat16):
    """x_ncw: (B, C_in, N) float32, PyTorch NCW layout.

    n_points is accepted but unused, exactly like the reference forward."""
    del n_points
    (conv1_w, conv1_b, conv2_w, conv2_b,
     lin1_w, lin1_b, lin2_w, lin2_b) = params
    B, C_in, N = x_ncw.shape
    D = conv1_w.shape[0]
    out_ch = lin2_w.shape[0]

    # ---- tiling --------------------------------------------------------------
    if batch_tile is None:
        batch_tile = next(bt for bt in (8, 4, 2, 1) if B % bt == 0)
    assert B % batch_tile == 0, "batch_tile must divide batch"
    if n_tile is None:
        n_tile = N if N <= 512 else 512
    assert n_tile == N or n_tile % 128 == 0, \
        "n_tile must be the full N or a multiple of 128"
    n_steps = pl.cdiv(N, n_tile)

    out_pad = _round_up(out_ch, 128)        # lane-dense output stores

    # ---- weights in kernel-friendly layouts (tiny, one-off XLA glue) ---------
    w1 = conv1_w.astype(jnp.float32)                           # (D, C) out,in
    b1 = conv1_b.reshape(D, 1).astype(jnp.float32)             # (D, 1)
    w2 = conv2_w.astype(matmul_dtype)                          # (D, D) out,in
    b2 = conv2_b.reshape(D, 1).astype(jnp.float32)             # (D, 1)
    w3 = lin1_w.T.astype(jnp.float32)                          # (D, D) in,out
    b3 = lin1_b.reshape(1, D).astype(jnp.float32)
    w4 = jnp.zeros((D, out_pad), jnp.float32).at[:, :out_ch].set(
        lin2_w.T.astype(jnp.float32))
    b4 = jnp.zeros((1, out_pad), jnp.float32).at[:, :out_ch].set(
        lin2_b.reshape(1, out_ch).astype(jnp.float32))

    x = x_ncw.astype(jnp.float32)           # NCW consumed directly, no transpose

    full = lambda arr: pl.BlockSpec(arr.shape, lambda b, n: (0,) * arr.ndim)
    kernel = functools.partial(_max_encoder_kernel, n_valid=N)

    out = pl.pallas_call(
        kernel,
        out_shape=jax.ShapeDtypeStruct((B, out_pad), jnp.float32),
        grid_spec=pltpu.PrefetchScalarGridSpec(
            num_scalar_prefetch=0,
            grid=(B // batch_tile, n_steps),
            in_specs=[
                pl.BlockSpec((batch_tile, C_in, n_tile), lambda b, n: (b, 0, n)),
                full(w1), full(b1),
                full(w2), full(b2),
                full(w3), full(b3),
                full(w4), full(b4),
            ],
            out_specs=pl.BlockSpec((batch_tile, out_pad), lambda b, n: (b, 0)),
            scratch_shapes=[pltpu.VMEM((batch_tile, D), jnp.float32)],
        ),
        compiler_params=pltpu.CompilerParams(
            # batch axis shards across TensorCores; N is the reduction axis.
            dimension_semantics=("parallel", "arbitrary"),
            # raised vs. the 16/32 MiB defaults, but with headroom under
            # v7x's 64 MiB physical VMEM for double buffers + scratch.
            vmem_limit_bytes=48 * 1024 * 1024,
        ),
    )(x, w1, b1, w2, b2, w3, b3, w4, b4)

    return out[:, :out_ch] if out_pad != out_ch else out


def init_params(key, input_channels, output_channels, dim):
    """Synthetic parameters with PyTorch-equivalent shapes.
    Conv1d(k=1) weight (out, in, 1) is stored squeezed as (out, in);
    Linear weight is stored as (out, in)."""
    ks = jax.random.split(key, 8)
    nrm = lambda k, shp, s: s * jax.random.normal(k, shp, dtype=jnp.float32)
    conv1_w = nrm(ks[0], (dim, input_channels), 0.2)
    conv1_b = nrm(ks[1], (dim,), 0.1)
    conv2_w = nrm(ks[2], (dim, dim), 0.2)
    conv2_b = nrm(ks[3], (dim,), 0.1)
    lin1_w = nrm(ks[4], (dim, dim), 0.2)
    lin1_b = nrm(ks[5], (dim,), 0.1)
    lin2_w = nrm(ks[6], (output_channels, dim), 0.2)
    lin2_b = nrm(ks[7], (output_channels,), 0.1)
    return (conv1_w, conv1_b, conv2_w, conv2_b, lin1_w, lin1_b, lin2_w, lin2_b)


def max_encoder_ref(x_ncw, params, matmul_dtype=None):
    """Pure-JAX reference mirroring the PyTorch forward.
    If matmul_dtype is set, the second pointwise conv uses those operand
    dtypes (f32 accumulation), matching the kernel's MXU precision."""
    (conv1_w, conv1_b, conv2_w, conv2_b,
     lin1_w, lin1_b, lin2_w, lin2_b) = params
    hi = jax.lax.Precision.HIGHEST
    x = x_ncw.astype(jnp.float32)
    h = jnp.einsum('dc,bcn->bdn', conv1_w, x, precision=hi) \
        + conv1_b[None, :, None]
    h = jnp.maximum(h, 0.0)
    if matmul_dtype is not None:
        h2 = jnp.einsum('ed,bdn->ben', conv2_w.astype(matmul_dtype),
                        h.astype(matmul_dtype),
                        preferred_element_type=jnp.float32)
    else:
        h2 = jnp.einsum('ed,bdn->ben', conv2_w, h, precision=hi)
    h2 = h2 + conv2_b[None, :, None]
    pooled = jnp.max(h2, axis=2)                       # max over points
    z = jnp.maximum(jnp.dot(pooled, lin1_w.T, precision=hi) + lin1_b, 0.0)
    return jnp.dot(z, lin2_w.T, precision=hi) + lin2_b


if __name__ == "__main__":
    key = jax.random.PRNGKey(0)
    ks = jax.random.split(key, 4)

    # ---- primary small config (module-consistent shapes) --------------------
    B, C_IN, N, DIM, OUT = 2, 4, 16, 32, 8
    x = jax.random.normal(ks[0], (B, C_IN, N), dtype=jnp.float32)
    n_points = jnp.full((B,), N, dtype=jnp.int32)       # unused, as in reference
    params = init_params(ks[1], C_IN, OUT, DIM)

    out = jax.block_until_ready(max_encoder(x, params, n_points))
    ref_match = max_encoder_ref(x, params, matmul_dtype=jnp.bfloat16)
    ref_f32 = max_encoder_ref(x, params)
    assert out.shape == (B, OUT)
    assert jnp.allclose(out, ref_match, atol=1e-2, rtol=1e-2), \
        "mismatch vs precision-matched reference"
    assert jnp.allclose(out, ref_f32, atol=3e-2, rtol=3e-2), \
        "mismatch vs f32 reference"

    # ---- second config: exercises the N-tiled reduction + masked last tile --
    B2, N2 = 4, 300
    x2 = jax.random.normal(ks[2], (B2, C_IN, N2), dtype=jnp.float32)
    params2 = init_params(ks[3], C_IN, OUT, DIM)
    out2 = jax.block_until_ready(max_encoder(x2, params2, None, n_tile=128))
    ref2 = max_encoder_ref(x2, params2, matmul_dtype=jnp.bfloat16)
    assert out2.shape == (B2, OUT)
    assert jnp.allclose(out2, ref2, atol=1e-2, rtol=1e-2), \
        "mismatch vs reference (tiled N with masked partial tile)"

    print("KERNEL_OK")
</pallas_src>

<mosaic_0001>
module attributes {stable_mosaic.version = 11 : i64} {
  func.func @_max_encoder_kernel(%arg0: i32, %arg1: i32, %arg2: memref<2x4x16xf32, #tpu.memory_space<vmem>>, %arg3: memref<32x4xf32, #tpu.memory_space<vmem>>, %arg4: memref<32x1xf32, #tpu.memory_space<vmem>>, %arg5: memref<32x32xbf16, #tpu.memory_space<vmem>>, %arg6: memref<32x1xf32, #tpu.memory_space<vmem>>, %arg7: memref<32x32xf32, #tpu.memory_space<vmem>>, %arg8: memref<1x32xf32, #tpu.memory_space<vmem>>, %arg9: memref<32x128xf32, #tpu.memory_space<vmem>>, %arg10: memref<1x128xf32, #tpu.memory_space<vmem>>, %arg11: memref<2x128xf32, #tpu.memory_space<vmem>>, %arg12: memref<2x32xf32, #tpu.memory_space<vmem>>) attributes {dimension_semantics = [#tpu.dimension_semantics<parallel>, #tpu.dimension_semantics<arbitrary>], iteration_bounds = array<i64: 1, 1>, scalar_prefetch = 0 : i64, scratch_operands = 1 : i64, tpu.core_type = #tpu.core_type<tc>, window_params = [{transform_indices = @transform_0, window_bounds = array<i64: 2, 4, 16>}, {pipeline_mode = #tpu.pipeline_mode<synchronous>, transform_indices = @transform_1, window_bounds = array<i64: 32, 4>}, {pipeline_mode = #tpu.pipeline_mode<synchronous>, transform_indices = @transform_2, window_bounds = array<i64: 32, 1>}, {pipeline_mode = #tpu.pipeline_mode<synchronous>, transform_indices = @transform_3, window_bounds = array<i64: 32, 32>}, {pipeline_mode = #tpu.pipeline_mode<synchronous>, transform_indices = @transform_4, window_bounds = array<i64: 32, 1>}, {pipeline_mode = #tpu.pipeline_mode<synchronous>, transform_indices = @transform_5, window_bounds = array<i64: 32, 32>}, {pipeline_mode = #tpu.pipeline_mode<synchronous>, transform_indices = @transform_6, window_bounds = array<i64: 1, 32>}, {pipeline_mode = #tpu.pipeline_mode<synchronous>, transform_indices = @transform_7, window_bounds = array<i64: 32, 128>}, {pipeline_mode = #tpu.pipeline_mode<synchronous>, transform_indices = @transform_8, window_bounds = array<i64: 1, 128>}, {transform_indices = @transform_9, window_bounds = array<i64: 2, 128>}]} {
    %c0_i32 = arith.constant 0 : i32
    %0 = arith.cmpi eq, %arg1, %c0_i32 : i32
    %1 = arith.extui %0 : i1 to i32
    %c0_i32_0 = arith.constant 0 : i32
    %2 = arith.cmpi ne, %1, %c0_i32_0 : i32
    scf.if %2 {
      %cst_28 = arith.constant 0xFF800000 : f32
      %86 = vector.broadcast %cst_28 : f32 to vector<2x32xf32>
      %c0_29 = arith.constant 0 : index
      %c0_30 = arith.constant 0 : index
      %87 = vector.load %arg12[%c0_29, %c0_30] : memref<2x32xf32, #tpu.memory_space<vmem>>, vector<2x32xf32>
      tpu.vector_store %arg12[%c0_29, %c0_30], %86 {strides = array<i32>} : memref<2x32xf32, #tpu.memory_space<vmem>>, vector<2x32xf32>,
    } else {
    }
    %c0 = arith.constant 0 : index
    %c0_1 = arith.constant 0 : index
    %3 = vector.load %arg3[%c0, %c0_1] : memref<32x4xf32, #tpu.memory_space<vmem>>, vector<32x4xf32>
    %4 = vector.extract_strided_slice %3 {offsets = [0, 0], sizes = [32, 1], strides = [1, 1]} : vector<32x4xf32> to vector<32x1xf32>
    %5 = vector.extract_strided_slice %3 {offsets = [0, 1], sizes = [32, 1], strides = [1, 1]} : vector<32x4xf32> to vector<32x1xf32>
    %6 = vector.extract_strided_slice %3 {offsets = [0, 2], sizes = [32, 1], strides = [1, 1]} : vector<32x4xf32> to vector<32x1xf32>
    %7 = vector.extract_strided_slice %3 {offsets = [0, 3], sizes = [32, 1], strides = [1, 1]} : vector<32x4xf32> to vector<32x1xf32>
    %c0_2 = arith.constant 0 : index
    %c0_3 = arith.constant 0 : index
    %8 = vector.load %arg4[%c0_2, %c0_3] : memref<32x1xf32, #tpu.memory_space<vmem>>, vector<32x1xf32>
    %c0_4 = arith.constant 0 : index
    %c0_5 = arith.constant 0 : index
    %9 = vector.load %arg6[%c0_4, %c0_5] : memref<32x1xf32, #tpu.memory_space<vmem>>, vector<32x1xf32>
    %c0_6 = arith.constant 0 : index
    %c0_7 = arith.constant 0 : index
    %10 = vector.load %arg5[%c0_6, %c0_7] : memref<32x32xbf16, #tpu.memory_space<vmem>>, vector<32x32xbf16>
    %c0_8 = arith.constant 0 : index
    %c0_9 = arith.constant 0 : index
    %c0_10 = arith.constant 0 : index
    %11 = vector.load %arg2[%c0_8, %c0_9, %c0_10] : memref<2x4x16xf32, #tpu.memory_space<vmem>>, vector<1x4x16xf32>
    %12 = vector.shape_cast %11 : vector<1x4x16xf32> to vector<4x16xf32>
    %13 = vector.extract_strided_slice %12 {offsets = [0, 0], sizes = [1, 16], strides = [1, 1]} : vector<4x16xf32> to vector<1x16xf32>
    %14 = vector.broadcast %4 : vector<32x1xf32> to vector<32x16xf32>
    %15 = vector.broadcast %13 : vector<1x16xf32> to vector<32x16xf32>
    %16 = arith.mulf %14, %15 : vector<32x16xf32>
    %17 = vector.extract_strided_slice %12 {offsets = [1, 0], sizes = [1, 16], strides = [1, 1]} : vector<4x16xf32> to vector<1x16xf32>
    %18 = vector.broadcast %5 : vector<32x1xf32> to vector<32x16xf32>
    %19 = vector.broadcast %17 : vector<1x16xf32> to vector<32x16xf32>
    %20 = arith.mulf %18, %19 : vector<32x16xf32>
    %21 = arith.addf %16, %20 : vector<32x16xf32>
    %22 = vector.extract_strided_slice %12 {offsets = [2, 0], sizes = [1, 16], strides = [1, 1]} : vector<4x16xf32> to vector<1x16xf32>
    %23 = vector.broadcast %6 : vector<32x1xf32> to vector<32x16xf32>
    %24 = vector.broadcast %22 : vector<1x16xf32> to vector<32x16xf32>
    %25 = arith.mulf %23, %24 : vector<32x16xf32>
    %26 = arith.addf %21, %25 : vector<32x16xf32>
    %27 = vector.extract_strided_slice %12 {offsets = [3, 0], sizes = [1, 16], strides = [1, 1]} : vector<4x16xf32> to vector<1x16xf32>
    %28 = vector.broadcast %7 : vector<32x1xf32> to vector<32x16xf32>
    %29 = vector.broadcast %27 : vector<1x16xf32> to vector<32x16xf32>
    %30 = arith.mulf %28, %29 : vector<32x16xf32>
    %31 = arith.addf %26, %30 : vector<32x16xf32>
    %32 = vector.broadcast %8 : vector<32x1xf32> to vector<32x16xf32>
    %33 = arith.addf %31, %32 : vector<32x16xf32>
    %cst = arith.constant 0.000000e+00 : f32
    %34 = vector.broadcast %cst : f32 to vector<32x16xf32>
    %35 = arith.maximumf %33, %34 : vector<32x16xf32>
    %36 = arith.truncf %35 : vector<32x16xf32> to vector<32x16xbf16>
    %cst_11 = arith.constant dense<0.000000e+00> : vector<32x16xf32>
    %37 = tpu.matmul %10, %36, %cst_11 {dimension_numbers = #tpu.dot_dimension_numbers<[1], [0], [0], [1], [0, 0, 1, 1], [], []>} : vector<32x32xbf16>, vector<32x16xbf16>, vector<32x16xf32> -> vector<32x16xf32>
    %38 = vector.broadcast %9 : vector<32x1xf32> to vector<32x16xf32>
    %39 = arith.addf %37, %38 : vector<32x16xf32>
    %cst_12 = arith.constant dense<0xFF800000> : vector<32xf32>
    %40 = vector.multi_reduction <maximumf>, %39, %cst_12 [1] : vector<32x16xf32> to vector<32xf32>
    %c0_13 = arith.constant 0 : index
    %c0_14 = arith.constant 0 : index
    %41 = vector.load %arg12[%c0_13, %c0_14] : memref<2x32xf32, #tpu.memory_space<vmem>>, vector<1x32xf32>
    %42 = vector.shape_cast %41 : vector<1x32xf32> to vector<32xf32>
    %43 = arith.maximumf %42, %40 : vector<32xf32>
    %c0_15 = arith.constant 0 : index
    %c0_16 = arith.constant 0 : index
    %44 = vector.load %arg12[%c0_15, %c0_16] : memref<2x32xf32, #tpu.memory_space<vmem>>, vector<1x32xf32>
    %45 = vector.shape_cast %44 : vector<1x32xf32> to vector<32xf32>
    %46 = vector.shape_cast %43 : vector<32xf32> to vector<1x32xf32>
    tpu.vector_store %arg12[%c0_15, %c0_16], %46 {strides = array<i32>} : memref<2x32xf32, #tpu.memory_space<vmem>>, vector<1x32xf32>,
    %c1 = arith.constant 1 : index
    %c0_17 = arith.constant 0 : index
    %c0_18 = arith.constant 0 : index
    %47 = vector.load %arg2[%c1, %c0_17, %c0_18] : memref<2x4x16xf32, #tpu.memory_space<vmem>>, vector<1x4x16xf32>
    %48 = vector.shape_cast %47 : vector<1x4x16xf32> to vector<4x16xf32>
    %49 = vector.extract_strided_slice %48 {offsets = [0, 0], sizes = [1, 16], strides = [1, 1]} : vector<4x16xf32> to vector<1x16xf32>
    %50 = vector.broadcast %4 : vector<32x1xf32> to vector<32x16xf32>
    %51 = vector.broadcast %49 : vector<1x16xf32> to vector<32x16xf32>
    %52 = arith.mulf %50, %51 : vector<32x16xf32>
    %53 = vector.extract_strided_slice %48 {offsets = [1, 0], sizes = [1, 16], strides = [1, 1]} : vector<4x16xf32> to vector<1x16xf32>
    %54 = vector.broadcast %5 : vector<32x1xf32> to vector<32x16xf32>
    %55 = vector.broadcast %53 : vector<1x16xf32> to vector<32x16xf32>
    %56 = arith.mulf %54, %55 : vector<32x16xf32>
    %57 = arith.addf %52, %56 : vector<32x16xf32>
    %58 = vector.extract_strided_slice %48 {offsets = [2, 0], sizes = [1, 16], strides = [1, 1]} : vector<4x16xf32> to vector<1x16xf32>
    %59 = vector.broadcast %6 : vector<32x1xf32> to vector<32x16xf32>
    %60 = vector.broadcast %58 : vector<1x16xf32> to vector<32x16xf32>
    %61 = arith.mulf %59, %60 : vector<32x16xf32>
    %62 = arith.addf %57, %61 : vector<32x16xf32>
    %63 = vector.extract_strided_slice %48 {offsets = [3, 0], sizes = [1, 16], strides = [1, 1]} : vector<4x16xf32> to vector<1x16xf32>
    %64 = vector.broadcast %7 : vector<32x1xf32> to vector<32x16xf32>
    %65 = vector.broadcast %63 : vector<1x16xf32> to vector<32x16xf32>
    %66 = arith.mulf %64, %65 : vector<32x16xf32>
    %67 = arith.addf %62, %66 : vector<32x16xf32>
    %68 = vector.broadcast %8 : vector<32x1xf32> to vector<32x16xf32>
    %69 = arith.addf %67, %68 : vector<32x16xf32>
    %cst_19 = arith.constant 0.000000e+00 : f32
    %70 = vector.broadcast %cst_19 : f32 to vector<32x16xf32>
    %71 = arith.maximumf %69, %70 : vector<32x16xf32>
    %72 = arith.truncf %71 : vector<32x16xf32> to vector<32x16xbf16>
    %cst_20 = arith.constant dense<0.000000e+00> : vector<32x16xf32>
    %73 = tpu.matmul %10, %72, %cst_20 {dimension_numbers = #tpu.dot_dimension_numbers<[1], [0], [0], [1], [0, 0, 1, 1], [], []>} : vector<32x32xbf16>, vector<32x16xbf16>, vector<32x16xf32> -> vector<32x16xf32>
    %74 = vector.broadcast %9 : vector<32x1xf32> to vector<32x16xf32>
    %75 = arith.addf %73, %74 : vector<32x16xf32>
    %cst_21 = arith.constant dense<0xFF800000> : vector<32xf32>
    %76 = vector.multi_reduction <maximumf>, %75, %cst_21 [1] : vector<32x16xf32> to vector<32xf32>
    %c1_22 = arith.constant 1 : index
    %c0_23 = arith.constant 0 : index
    %77 = vector.load %arg12[%c1_22, %c0_23] : memref<2x32xf32, #tpu.memory_space<vmem>>, vector<1x32xf32>
    %78 = vector.shape_cast %77 : vector<1x32xf32> to vector<32xf32>
    %79 = arith.maximumf %78, %76 : vector<32xf32>
    %c1_24 = arith.constant 1 : index
    %c0_25 = arith.constant 0 : index
    %80 = vector.load %arg12[%c1_24, %c0_25] : memref<2x32xf32, #tpu.memory_space<vmem>>, vector<1x32xf32>
    %81 = vector.shape_cast %80 : vector<1x32xf32> to vector<32xf32>
    %82 = vector.shape_cast %79 : vector<32xf32> to vector<1x32xf32>
    tpu.vector_store %arg12[%c1_24, %c0_25], %82 {strides = array<i32>} : memref<2x32xf32, #tpu.memory_space<vmem>>, vector<1x32xf32>,
    %c0_i32_26 = arith.constant 0 : i32
    %83 = arith.cmpi eq, %arg1, %c0_i32_26 : i32
    %84 = arith.extui %83 : i1 to i32
    %c0_i32_27 = arith.constant 0 : i32
    %85 = arith.cmpi ne, %84, %c0_i32_27 : i32
    scf.if %85 {
      %c0_28 = arith.constant 0 : index
      %c0_29 = arith.constant 0 : index
      %86 = vector.load %arg12[%c0_28, %c0_29] : memref<2x32xf32, #tpu.memory_space<vmem>>, vector<2x32xf32>
      %c0_30 = arith.constant 0 : index
      %c0_31 = arith.constant 0 : index
      %87 = vector.load %arg7[%c0_30, %c0_31] : memref<32x32xf32, #tpu.memory_space<vmem>>, vector<32x32xf32>
      %cst_32 = arith.constant dense<0.000000e+00> : vector<2x32xf32>
      %88 = tpu.matmul %86, %87, %cst_32 {dimension_numbers = #tpu.dot_dimension_numbers<[1], [0], [0], [1], [0, 0, 1, 1], [], []>} : vector<2x32xf32>, vector<32x32xf32>, vector<2x32xf32> -> vector<2x32xf32>
      %c0_33 = arith.constant 0 : index
      %c0_34 = arith.constant 0 : index
      %89 = vector.load %arg8[%c0_33, %c0_34] : memref<1x32xf32, #tpu.memory_space<vmem>>, vector<1x32xf32>
      %90 = vector.broadcast %89 : vector<1x32xf32> to vector<2x32xf32>
      %91 = arith.addf %88, %90 : vector<2x32xf32>
      %cst_35 = arith.constant 0.000000e+00 : f32
      %92 = vector.broadcast %cst_35 : f32 to vector<2x32xf32>
      %93 = arith.maximumf %91, %92 : vector<2x32xf32>
      %c0_36 = arith.constant 0 : index
      %c0_37 = arith.constant 0 : index
      %94 = vector.load %arg9[%c0_36, %c0_37] : memref<32x128xf32, #tpu.memory_space<vmem>>, vector<32x128xf32>
      %cst_38 = arith.constant dense<0.000000e+00> : vector<2x128xf32>
      %95 = tpu.matmul %93, %94, %cst_38 {dimension_numbers = #tpu.dot_dimension_numbers<[1], [0], [0], [1], [0, 0, 1, 1], [], []>} : vector<2x32xf32>, vector<32x128xf32>, vector<2x128xf32> -> vector<2x128xf32>
      %c0_39 = arith.constant 0 : index
      %c0_40 = arith.constant 0 : index
      %96 = vector.load %arg10[%c0_39, %c0_40] : memref<1x128xf32, #tpu.memory_space<vmem>>, vector<1x128xf32>
      %97 = vector.broadcast %96 : vector<1x128xf32> to vector<2x128xf32>
      %98 = arith.addf %95, %97 : vector<2x128xf32>
      %c0_41 = arith.constant 0 : index
      %c0_42 = arith.constant 0 : index
      %99 = vector.load %arg11[%c0_41, %c0_42] : memref<2x128xf32, #tpu.memory_space<vmem>>, vector<2x128xf32>
      tpu.vector_store %arg11[%c0_41, %c0_42], %98 {strides = array<i32>} : memref<2x128xf32, #tpu.memory_space<vmem>>, vector<2x128xf32>,
    } else {
    }
    return
  }
  func.func @transform_0(%arg0: i32, %arg1: i32) -> (i32, i32, i32) {
    %c0_i32 = arith.constant 0 : i32
    %c0_i32_0 = arith.constant 0 : i32
    return %arg0, %c0_i32, %arg1 : i32, i32, i32
  }
  func.func @transform_1(%arg0: i32, %arg1: i32) -> (i32, i32) {
    %c0_i32 = arith.constant 0 : i32
    %c0_i32_0 = arith.constant 0 : i32
    %c0_i32_1 = arith.constant 0 : i32
    return %c0_i32, %c0_i32_0 : i32, i32
  }
  func.func @transform_2(%arg0: i32, %arg1: i32) -> (i32, i32) {
    %c0_i32 = arith.constant 0 : i32
    %c0_i32_0 = arith.constant 0 : i32
    %c0_i32_1 = arith.constant 0 : i32
    return %c0_i32, %c0_i32_0 : i32, i32
  }
  func.func @transform_3(%arg0: i32, %arg1: i32) -> (i32, i32) {
    %c0_i32 = arith.constant 0 : i32
    %c0_i32_0 = arith.constant 0 : i32
    %c0_i32_1 = arith.constant 0 : i32
    return %c0_i32, %c0_i32_0 : i32, i32
  }
  func.func @transform_4(%arg0: i32, %arg1: i32) -> (i32, i32) {
    %c0_i32 = arith.constant 0 : i32
    %c0_i32_0 = arith.constant 0 : i32
    %c0_i32_1 = arith.constant 0 : i32
    return %c0_i32, %c0_i32_0 : i32, i32
  }
  func.func @transform_5(%arg0: i32, %arg1: i32) -> (i32, i32) {
    %c0_i32 = arith.constant 0 : i32
    %c0_i32_0 = arith.constant 0 : i32
    %c0_i32_1 = arith.constant 0 : i32
    return %c0_i32, %c0_i32_0 : i32, i32
  }
  func.func @transform_6(%arg0: i32, %arg1: i32) -> (i32, i32) {
    %c0_i32 = arith.constant 0 : i32
    %c0_i32_0 = arith.constant 0 : i32
    %c0_i32_1 = arith.constant 0 : i32
    return %c0_i32, %c0_i32_0 : i32, i32
  }
  func.func @transform_7(%arg0: i32, %arg1: i32) -> (i32, i32) {
    %c0_i32 = arith.constant 0 : i32
    %c0_i32_0 = arith.constant 0 : i32
    %c0_i32_1 = arith.constant 0 : i32
    return %c0_i32, %c0_i32_0 : i32, i32
  }
  func.func @transform_8(%arg0: i32, %arg1: i32) -> (i32, i32) {
    %c0_i32 = arith.constant 0 : i32
    %c0_i32_0 = arith.constant 0 : i32
    %c0_i32_1 = arith.constant 0 : i32
    return %c0_i32, %c0_i32_0 : i32, i32
  }
  func.func @transform_9(%arg0: i32, %arg1: i32) -> (i32, i32) {
    %c0_i32 = arith.constant 0 : i32
    %c0_i32_0 = arith.constant 0 : i32
    return %arg0, %c0_i32 : i32, i32
  }
}

</mosaic_0001>

<llo_original>
// kernel: tpu_custom_call.1
$region0: #{tpu_custom_call.1}
  #allocation0 [shape = 'u32[]', space=smem, size = 0x4, offset = 0x4, fixed_abs, tag = 'smem constant byte address 0x4 - core index']
  #allocation1 [shape = 'u32[72,128]{1,0:T(1,128)}', space=vmem, size = 0x9000, scoped, tag = 'internal scratch']
  #allocation2 [shape = 'f32[2,32]{1,0:T(2,128)}', space=vmem, size = 0x400, scoped, tag = 'scratch operand']
  %s0 = inlined_call_operand.vmem [shape: f32[2,4,16], index: 0, kind: input, shape index: {}]
  %s1 = inlined_call_operand.vmem [shape: f32[32,4], index: 1, kind: input, shape index: {}]
  %s2 = inlined_call_operand.vmem [shape: f32[32,1], index: 2, kind: input, shape index: {}]
  %s3 = inlined_call_operand.vmem [shape: bf16[32,32], index: 3, kind: input, shape index: {}]
  %s4 = inlined_call_operand.vmem [shape: f32[32,1], index: 4, kind: input, shape index: {}]
  %s5 = inlined_call_operand.vmem [shape: f32[32,32], index: 5, kind: input, shape index: {}]
  %s6 = inlined_call_operand.vmem [shape: f32[1,32], index: 6, kind: input, shape index: {}]
  %s7 = inlined_call_operand.vmem [shape: f32[32,128], index: 7, kind: input, shape index: {}]
  %s8 = inlined_call_operand.vmem [shape: f32[1,128], index: 8, kind: input, shape index: {}]
  %s9 = inlined_call_operand.hbm [shape: f32[2,128], index: 9, kind: output, shape index: {}]
  %s10 = sld [smem:[#allocation0]]
  $region54: #{tpu_custom_call.1} parent=0
    _
  %s12 = ssub.s32 1, %s10
  %s13 = scalar_select 0, %s12, %s10
  $region1: #{tpu_custom_call.1} parent=0
    #allocation3 [shape = 'u8[1024]{0}', space=vmem, size = 0x400, scoped, tag = 'output window, operand 0, single buffered']
    #allocation4 [shape = 's32[1]{0}', space=sflag, size = 0x4, scoped, tag = 'scoped memory for tpu_custom_call.1']
    %14 = vsyncpa [#allocation4], 0
    // Predicated region
    $region2: #{tpu_custom_call.1} parent=1 // pred_check
      _
    $region3: #{tpu_custom_call.1} parent=1 // pred_check_branch
      %16 = sbr.rel (0) target = $region5
    $region4: #{tpu_custom_call.1} parent=1 // pred_region
      _
    $region5: #{tpu_custom_call.1} parent=1 // pred_fallthru
      _
    // Predicated region
    $region6: #{tpu_custom_call.1} parent=1 // pred_check
      _
    $region7: #{tpu_custom_call.1} parent=1 // pred_check_branch
      %18 = sbr.rel (0) target = $region9
    $region8: #{tpu_custom_call.1} parent=1 // pred_region
      _
    $region9: #{tpu_custom_call.1} parent=1 // pred_fallthru
      _
    // Predicated region
    $region10: #{tpu_custom_call.1} parent=1 // pred_check
      _
    $region11: #{tpu_custom_call.1} parent=1 // pred_check_branch
      %20 = sbr.rel (0) target = $region13
    $region12: #{tpu_custom_call.1} parent=1 // pred_region
      _
    $region13: #{tpu_custom_call.1} parent=1 // pred_fallthru
      _
    // Predicated region
    $region14: #{tpu_custom_call.1} parent=1 // pred_check
      _
    $region15: #{tpu_custom_call.1} parent=1 // pred_check_branch
      %22 = sbr.rel (0) target = $region17
    $region16: #{tpu_custom_call.1} parent=1 // pred_region
      _
    $region17: #{tpu_custom_call.1} parent=1 // pred_fallthru
      _
    // Predicated region
    $region18: #{tpu_custom_call.1} parent=1 // pred_check
      _
    $region19: #{tpu_custom_call.1} parent=1 // pred_check_branch
      %24 = sbr.rel (0) target = $region21
    $region20: #{tpu_custom_call.1} parent=1 // pred_region
      _
    $region21: #{tpu_custom_call.1} parent=1 // pred_fallthru
      _
    // Predicated region
    $region22: #{tpu_custom_call.1} parent=1 // pred_check
      _
    $region23: #{tpu_custom_call.1} parent=1 // pred_check_branch
      %26 = sbr.rel (0) target = $region25
    $region24: #{tpu_custom_call.1} parent=1 // pred_region
      _
    $region25: #{tpu_custom_call.1} parent=1 // pred_fallthru
      _
    // Predicated region
    $region26: #{tpu_custom_call.1} parent=1 // pred_check
      _
    $region27: #{tpu_custom_call.1} parent=1 // pred_check_branch
      %28 = sbr.rel (0) target = $region29
    $region28: #{tpu_custom_call.1} parent=1 // pred_region
      _
    $region29: #{tpu_custom_call.1} parent=1 // pred_fallthru
      _
    // Predicated region
    $region30: #{tpu_custom_call.1} parent=1 // pred_check
      _
    $region31: #{tpu_custom_call.1} parent=1 // pred_check_branch
      %30 = sbr.rel (0) target = $region33
    $region32: #{tpu_custom_call.1} parent=1 // pred_region
      _
    $region33: #{tpu_custom_call.1} parent=1 // pred_fallthru
      _
    // Predicated region
    $region34: #{tpu_custom_call.1} parent=1 // pred_check
      _
    $region35: #{tpu_custom_call.1} parent=1 // pred_check_branch
      %32 = sbr.rel (0) target = $region37
    $region36: #{tpu_custom_call.1} parent=1 // pred_region
      _
    $region37: #{tpu_custom_call.1} parent=1 // pred_fallthru
      _
    %p34 = scmp.eq.s32.totalorder 0, 0
    // Predicated region
    $region38: #{tpu_custom_call.1} parent=1 // pred_check
      %p35 = pneg %p34
    $region39: #{tpu_custom_call.1} parent=1 // pred_check_branch
      %37 = sbr.rel (%p35) target = $region41
    $region40: #{tpu_custom_call.1} parent=1 // pred_region
      %vm38 = vcmask 254976
      %39 = vst.msk [vmem:[#allocation2] sm:$0x3] %vm38, -inf
    $region41: #{tpu_custom_call.1} parent=1 // pred_fallthru
      _
    %v40 = vld [vmem:[%s1] sm:$0xff]
    %v41 = vld [vmem:[%s1 + $0x8] sm:$0xff]
    %v42 = vld [vmem:[%s1 + $0x10] sm:$0xff]
    %v43 = vld [vmem:[%s1 + $0x18] sm:$0xff]
    %v44 = vld [vmem:[%s2] sm:$0xff]
    %v45 = vld [vmem:[%s2 + $0x8] sm:$0xff]
    %v46 = vld [vmem:[%s2 + $0x10] sm:$0xff]
    %v47 = vld [vmem:[%s2 + $0x18] sm:$0xff]
    %v48 = vld [vmem:[%s4] sm:$0xff]
    %v49 = vld [vmem:[%s4 + $0x8] sm:$0xff]
    %v50 = vld [vmem:[%s4 + $0x10] sm:$0xff]
    %v51 = vld [vmem:[%s4 + $0x18] sm:$0xff]
    %v52 = vld [vmem:[%s3] sm:$0xf]
    %v53 = vld [vmem:[%s3 + $0x4] sm:$0xf]
    %v54 = vld [vmem:[%s3 + $0x8] sm:$0xf]
    %v55 = vld [vmem:[%s3 + $0xc] sm:$0xf]
    %v56 = vld [vmem:[%s0] sm:$0xf]
    %58 = vset.pattern.permute.xlu0 0
    %59 = vperm.xlu0 %58, %v40
    %v60 = vpop.permute.xlu0 %59
    %63 = vset.pattern.permute.xlu0 0
    %64 = vperm.xlu0 %63, %v41
    %v65 = vpop.permute.xlu0 %64
    %68 = vset.pattern.permute.xlu0 0
    %69 = vperm.xlu0 %68, %v42
    %v70 = vpop.permute.xlu0 %69
    %73 = vset.pattern.permute.xlu0 0
    %74 = vperm.xlu0 %73, %v43
    %v75 = vpop.permute.xlu0 %74
    %v77 = vperm.slane %v56, 0
    %v78 = vmul.f32 %v60, %v77
    %v79 = vmul.f32 %v65, %v77
    %v80 = vmul.f32 %v70, %v77
    %v81 = vmul.f32 %v75, %v77
    %82 = vset.pattern.permute.xlu0 1
    %83 = vperm.xlu0 %82, %v40
    %v84 = vpop.permute.xlu0 %83
    %86 = vset.pattern.permute.xlu0 1
    %87 = vperm.xlu0 %86, %v41
    %v88 = vpop.permute.xlu0 %87
    %90 = vset.pattern.permute.xlu0 1
    %91 = vperm.xlu0 %90, %v42
    %v92 = vpop.permute.xlu0 %91
    %94 = vset.pattern.permute.xlu0 1
    %95 = vperm.xlu0 %94, %v43
    %v96 = vpop.permute.xlu0 %95
    %v98 = vperm.slane %v56, 1
    %v99 = vmul.f32 %v84, %v98
    %v100 = vmul.f32 %v88, %v98
    %v101 = vmul.f32 %v92, %v98
    %v102 = vmul.f32 %v96, %v98
    %v103 = vadd.f32 %v78, %v99
    %v104 = vadd.f32 %v79, %v100
    %v105 = vadd.f32 %v80, %v101
    %v106 = vadd.f32 %v81, %v102
    %107 = vset.pattern.permute.xlu0 2
    %108 = vperm.xlu0 %107, %v40
    %v109 = vpop.permute.xlu0 %108
    %111 = vset.pattern.permute.xlu0 2
    %112 = vperm.xlu0 %111, %v41
    %v113 = vpop.permute.xlu0 %112
    %115 = vset.pattern.permute.xlu0 2
    %116 = vperm.xlu0 %115, %v42
    %v117 = vpop.permute.xlu0 %116
    %119 = vset.pattern.permute.xlu0 2
    %120 = vperm.xlu0 %119, %v43
    %v121 = vpop.permute.xlu0 %120
    %v123 = vperm.slane %v56, 2
    %v124 = vmul.f32 %v109, %v123
    %v125 = vmul.f32 %v113, %v123
    %v126 = vmul.f32 %v117, %v123
    %v127 = vmul.f32 %v121, %v123
    %v128 = vadd.f32 %v103, %v124
    %v129 = vadd.f32 %v104, %v125
    %v130 = vadd.f32 %v105, %v126
    %v131 = vadd.f32 %v106, %v127
    %132 = vset.pattern.permute.xlu0 3
    %133 = vperm.xlu0 %132, %v40
    %v134 = vpop.permute.xlu0 %133
    %136 = vset.pattern.permute.xlu0 3
    %137 = vperm.xlu0 %136, %v41
    %v138 = vpop.permute.xlu0 %137
    %140 = vset.pattern.permute.xlu0 3
    %141 = vperm.xlu0 %140, %v42
    %v142 = vpop.permute.xlu0 %141
    %144 = vset.pattern.permute.xlu0 3
    %145 = vperm.xlu0 %144, %v43
    %v146 = vpop.permute.xlu0 %145
    %v148 = vperm.slane %v56, 3
    %v149 = vmul.f32 %v134, %v148
    %v150 = vmul.f32 %v138, %v148
    %v151 = vmul.f32 %v142, %v148
    %v152 = vmul.f32 %v146, %v148
    %v153 = vadd.f32 %v128, %v149
    %v154 = vadd.f32 %v129, %v150
    %v155 = vadd.f32 %v130, %v151
    %v156 = vadd.f32 %v131, %v152
    %158 = vset.pattern.permute.xlu0 0
    %159 = vperm.xlu0 %158, %v44
    %v160 = vpop.permute.xlu0 %159
    %163 = vset.pattern.permute.xlu0 0
    %164 = vperm.xlu0 %163, %v45
    %v165 = vpop.permute.xlu0 %164
    %168 = vset.pattern.permute.xlu0 0
    %169 = vperm.xlu0 %168, %v46
    %v170 = vpop.permute.xlu0 %169
    %173 = vset.pattern.permute.xlu0 0
    %174 = vperm.xlu0 %173, %v47
    %v175 = vpop.permute.xlu0 %174
    %v177 = vadd.f32 %v153, %v160
    %v178 = vadd.f32 %v154, %v165
    %v179 = vadd.f32 %v155, %v170
    %v180 = vadd.f32 %v156, %v175
    %v181 = vmax.f32 %v177, 0.0
    %v182 = vmax.f32 %v178, 0.0
    %v183 = vmax.f32 %v179, 0.0
    %v184 = vmax.f32 %v180, 0.0
    %v185 = vpack.c.bf16 %v182, %v181
    %v186 = vpack.c.bf16 %v184, %v183
    %188 = vset.pattern.permute.xlu0 0
    %189 = vperm.xlu0 %188, %v48
    %v190 = vpop.permute.xlu0 %189
    %193 = vset.pattern.permute.xlu0 0
    %194 = vperm.xlu0 %193, %v49
    %v195 = vpop.permute.xlu0 %194
    %198 = vset.pattern.permute.xlu0 0
    %199 = vperm.xlu0 %198, %v50
    %v200 = vpop.permute.xlu0 %199
    %203 = vset.pattern.permute.xlu0 0
    %204 = vperm.xlu0 %203, %v51
    %v205 = vpop.permute.xlu0 %204
    %v211 = vunpack.c.l.b16 %v52
    %v212 = vunpack.c.l.b16 %v53
    %v213 = vunpack.c.l.b16 %v54
    %v214 = vunpack.c.l.b16 %v55
    %v215 = vpack.c.b16 %v212, %v211
    %v216 = vpack.c.b16 %v214, %v213
    %vm217 = vcmask 261120
    %v219 = vsel %vm217, %v215, 0
    %v222 = vsel %vm217, %v216, 0
    %224 = vmatpush.bf16.msra.mxu0 0
    %225 = vmatpush.bf16.msra.mxu0 0
    %226 = vmatpush.bf16.msra.mxu0 0
    %227 = vmatpush.bf16.msra.mxu0 0
    %228 = vmatpush.bf16.msra.mxu0 0
    %229 = vmatpush.bf16.msra.mxu0 0
    %230 = vmatpush.bf16.msra.mxu0 %v186
    %231 = vmatpush.bf16.msra.mxu0 %v185
    %232 = vmatmul.bf16.gmra.mxu0 %v219
    %v233 = vpop.f32.mrf.mxu0
    %v234 = vadd.f32 %v190, %v233
    %v235 = vpop.f32.mrf.mxu0
    %v236 = vadd.f32 %v195, %v235
    %237 = vmatmul.bf16.gmra.mxu0 %v222
    %v238 = vpop.f32.mrf.mxu0
    %v239 = vadd.f32 %v200, %v238
    %v240 = vpop.f32.mrf.mxu0
    %v241 = vadd.f32 %v205, %v240
    %242 = vdwg.mxu0
    %vm243 = vcmask 130048
    %v244 = vsel %vm243, %v234, -inf
    %245 = vmax.xlane.f32.xlu0 %v244
    %v246 = vpop.xlane.xlu0 %245
    %v247 = vsel %vm243, %v236, -inf
    %248 = vmax.xlane.f32.xlu0 %v247
    %v249 = vpop.xlane.xlu0 %248
    %v250 = vsel %vm243, %v239, -inf
    %251 = vmax.xlane.f32.xlu0 %v250
    %v252 = vpop.xlane.xlu0 %251
    %v253 = vsel %vm243, %v241, -inf
    %254 = vmax.xlane.f32.xlu0 %v253
    %v255 = vpop.xlane.xlu0 %254
    %v256 = vld [vmem:[#allocation2] sm:$0x1]
    %v261 = vlaneseq
    %v262 = vand.u32 %v261, 127
    %v263 = vperm.slane %v246, %v262
    %v264 = vadd.s32 %v262, 4294967288
    %v265 = vperm.slane %v249, %v264
    %vm266 = vcmask 130112
    %v267 = vsel %vm266, %v265, %v263
    %v268 = vadd.s32 %v262, 4294967280
    %v269 = vperm.slane %v252, %v268
    %vm270 = vcmask 195712
    %v271 = vsel %vm270, %v269, %v267
    %v272 = vadd.s32 %v262, 4294967272
    %v273 = vperm.slane %v255, %v272
    %vm274 = vcmask 261312
    %v275 = vsel %vm274, %v273, %v271
    %v277 = vmax.f32 %v256, %v275
    %vm278 = vcmask 253952
    %279 = vst.msk [vmem:[#allocation2] sm:$0x1] %vm278, %v277
    %s280 = scalar_lea.vmem %s0, 4
    %v281 = vld [vmem:[%s280] sm:$0xf]
    %v282 = vperm.slane %v281, 0
    %v283 = vmul.f32 %v60, %v282
    %v284 = vmul.f32 %v65, %v282
    %v285 = vmul.f32 %v70, %v282
    %v286 = vmul.f32 %v75, %v282
    %v287 = vperm.slane %v281, 1
    %v288 = vmul.f32 %v84, %v287
    %v289 = vmul.f32 %v88, %v287
    %v290 = vmul.f32 %v92, %v287
    %v291 = vmul.f32 %v96, %v287
    %v292 = vadd.f32 %v283, %v288
    %v293 = vadd.f32 %v284, %v289
    %v294 = vadd.f32 %v285, %v290
    %v295 = vadd.f32 %v286, %v291
    %v296 = vperm.slane %v281, 2
    %v297 = vmul.f32 %v109, %v296
    %v298 = vmul.f32 %v113, %v296
    %v299 = vmul.f32 %v117, %v296
    %v300 = vmul.f32 %v121, %v296
    %v301 = vadd.f32 %v292, %v297
    %v302 = vadd.f32 %v293, %v298
    %v303 = vadd.f32 %v294, %v299
    %v304 = vadd.f32 %v295, %v300
    %v305 = vperm.slane %v281, 3
    %v306 = vmul.f32 %v134, %v305
    %v307 = vmul.f32 %v138, %v305
    %v308 = vmul.f32 %v142, %v305
    %v309 = vmul.f32 %v146, %v305
    %v310 = vadd.f32 %v301, %v306
    %v311 = vadd.f32 %v302, %v307
    %v312 = vadd.f32 %v303, %v308
    %v313 = vadd.f32 %v304, %v309
    %v314 = vadd.f32 %v310, %v160
    %v315 = vadd.f32 %v311, %v165
    %v316 = vadd.f32 %v312, %v170
    %v317 = vadd.f32 %v313, %v175
    %v318 = vmax.f32 %v314, 0.0
    %v319 = vmax.f32 %v315, 0.0
    %v320 = vmax.f32 %v316, 0.0
    %v321 = vmax.f32 %v317, 0.0
    %v322 = vpack.c.bf16 %v319, %v318
    %v323 = vpack.c.bf16 %v321, %v320
    %324 = vmatpush.bf16.msra.mxu0 0
    %325 = vmatpush.bf16.msra.mxu0 0
    %326 = vmatpush.bf16.msra.mxu0 0
    %327 = vmatpush.bf16.msra.mxu0 0
    %328 = vmatpush.bf16.msra.mxu0 0
    %329 = vmatpush.bf16.msra.mxu0 0
    %330 = vmatpush.bf16.msra.mxu0 %v323
    %331 = vmatpush.bf16.msra.mxu0 %v322
    %332 = vmatmul.bf16.gmra.mxu0 %v219
    %v333 = vpop.f32.mrf.mxu0
    %v334 = vadd.f32 %v190, %v333
    %v335 = vpop.f32.mrf.mxu0
    %v336 = vadd.f32 %v195, %v335
    %337 = vmatmul.bf16.gmra.mxu0 %v222
    %v338 = vpop.f32.mrf.mxu0
    %v339 = vadd.f32 %v200, %v338
    %v340 = vpop.f32.mrf.mxu0
    %v341 = vadd.f32 %v205, %v340
    %342 = vdwg.mxu0
    %v343 = vsel %vm243, %v334, -inf
    %344 = vmax.xlane.f32.xlu0 %v343
    %v345 = vpop.xlane.xlu0 %344
    %v346 = vsel %vm243, %v336, -inf
    %347 = vmax.xlane.f32.xlu0 %v346
    %v348 = vpop.xlane.xlu0 %347
    %v349 = vsel %vm243, %v339, -inf
    %350 = vmax.xlane.f32.xlu0 %v349
    %v351 = vpop.xlane.xlu0 %350
    %v352 = vsel %vm243, %v341, -inf
    %353 = vmax.xlane.f32.xlu0 %v352
    %v354 = vpop.xlane.xlu0 %353
    %v355 = vld [vmem:[#allocation2 + $0x1] sm:$0x1]
    %v360 = vperm.slane %v345, %v262
    %v361 = vperm.slane %v348, %v264
    %v362 = vsel %vm266, %v361, %v360
    %v363 = vperm.slane %v351, %v268
    %v364 = vsel %vm270, %v363, %v362
    %v365 = vperm.slane %v354, %v272
    %v366 = vsel %vm274, %v365, %v364
    %v368 = vmax.f32 %v355, %v366
    %369 = vst.msk [vmem:[#allocation2 + $0x1] sm:$0x1] %vm278, %v368
    // Predicated region
    $region42: #{tpu_custom_call.1} parent=1 // pred_check
      %p370 = pneg %p34
    $region43: #{tpu_custom_call.1} parent=1 // pred_check_branch
      %372 = sbr.rel (%p370) target = $region45
    $region44: #{tpu_custom_call.1} parent=1 // pred_region
      %v373 = vld [vmem:[#allocation2] sm:$0x3]
      %v374 = vld [vmem:[%s5] sm:$0xff]
      %v375 = vld [vmem:[%s5 + $0x8] sm:$0xff]
      %v376 = vld [vmem:[%s5 + $0x10] sm:$0xff]
      %v377 = vld [vmem:[%s5 + $0x18] sm:$0xff]
      %v378 = vld [vmem:[%s6] sm:$0x1]
      %v380 = vperm.slane %v378, 0
      %v383 = vsel %vm217, %v373, 0
      %385 = vmatpush.msra.mxu0 0.0
      %386 = vmatpush.msra.mxu0 0.0
      %387 = vmatpush.msra.mxu0 0.0
      %388 = vmatpush.msra.mxu0 0.0
      %389 = vmatpush.msra.mxu0 0.0
      %390 = vmatpush.msra.mxu0 0.0
      %391 = vmatpush.msra.mxu0 0.0
      %392 = vmatpush.msra.mxu0 0.0
      %393 = vmatpush.msra.mxu0 0.0
      %394 = vmatpush.msra.mxu0 0.0
      %395 = vmatpush.msra.mxu0 0.0
      %396 = vmatpush.msra.mxu0 0.0
      %397 = vmatpush.msra.mxu0 %v377
      %398 = vmatpush.msra.mxu0 %v376
      %399 = vmatpush.msra.mxu0 %v375
      %400 = vmatpush.msra.mxu0 %v374
      %401 = vmatmul.f32.gmra.mxu0 %v383
      %v402 = vpop.f32.mrf.mxu0
      %v403 = vadd.f32 %v380, %v402
      %404 = vdwg.mxu0
      %v405 = vmax.f32 %v403, 0.0
      %v406 = vld [vmem:[%s7] sm:$0xff]
      %v407 = vld [vmem:[%s7 + $0x8] sm:$0xff]
      %v408 = vld [vmem:[%s7 + $0x10] sm:$0xff]
      %v409 = vld [vmem:[%s7 + $0x18] sm:$0xff]
      %v410 = vld [vmem:[%s8] sm:$0x1]
      %v412 = vperm.slane %v410, 0
      %v415 = vsel %vm217, %v405, 0
      %417 = vmatpush.msra.mxu0 0.0
      %418 = vmatpush.msra.mxu0 0.0
      %419 = vmatpush.msra.mxu0 0.0
      %420 = vmatpush.msra.mxu0 0.0
      %421 = vmatpush.msra.mxu0 0.0
      %422 = vmatpush.msra.mxu0 0.0
      %423 = vmatpush.msra.mxu0 0.0
      %424 = vmatpush.msra.mxu0 0.0
      %425 = vmatpush.msra.mxu0 0.0
      %426 = vmatpush.msra.mxu0 0.0
      %427 = vmatpush.msra.mxu0 0.0
      %428 = vmatpush.msra.mxu0 0.0
      %429 = vmatpush.msra.mxu0 %v409
      %430 = vmatpush.msra.mxu0 %v408
      %431 = vmatpush.msra.mxu0 %v407
      %432 = vmatpush.msra.mxu0 %v406
      %433 = vmatmul.f32.gmra.mxu0 %v415
      %v434 = vpop.f32.mrf.mxu0
      %v435 = vadd.f32 %v412, %v434
      %436 = vdwg.mxu0
      %437 = vst [vmem:[#allocation3] sm:$0x3] %v435
    $region45: #{tpu_custom_call.1} parent=1 // pred_fallthru
      _
    // Predicated region
    $region46: #{tpu_custom_call.1} parent=1 // pred_check
      _
    $region47: #{tpu_custom_call.1} parent=1 // pred_check_branch
      %439 = sbr.rel (0) target = $region49
    $region48: #{tpu_custom_call.1} parent=1 // pred_region
      %441 = vsyncadd [#allocation4], 0
      %s443 = sshll.u32 [#allocation3], 4
      %s444 = int_to_ptr.vmem [resolvable:$true] %s443
      %s445 = sshll.u32 %s9, 4
      %s446 = int_to_ptr.hbm [resolvable:$true] %s445
      %448 = dma.vmem_to_hbm [thread:$0]  %s444, 32, %s446, [#allocation4]
    $region49: #{tpu_custom_call.1} parent=1 // pred_fallthru
      _
    // Predicated region
    $region50: #{tpu_custom_call.1} parent=1 // pred_check
      _
    $region51: #{tpu_custom_call.1} parent=1 // pred_check_branch
      %450 = sbr.rel (0) target = $region53
    $region52: #{tpu_custom_call.1} parent=1 // pred_region
      %452 = dma.done [#allocation4], 32
    $region53: #{tpu_custom_call.1} parent=1 // pred_fallthru
      _
    %453 = vsyncpa [#allocation4], 1

</llo_original>
